<compile_context>
chip_gen: v7x
topology: tpu7x:2x2x1
jax: 0.10.0
libtpu: 0.0.40
codegen_flags: <defaults>
</compile_context>

<pallas_src>
import functools

import jax
import jax.numpy as jnp
from jax.experimental import pallas as pl
from jax.experimental.pallas import tpu as pltpu

LANES = 128
MAX_BLOCK_ROWS = 2048   # 2048 x 128 x 4B = 1 MiB per f32 block
NUM_SHARDS = 2          # leading "parallel" axis (used by v7x megacore)


def _l2_ignore_kernel(x_ref, t_ref, sum_ref, cnt_ref, *,
                      ignore_value, total_n, blocks_per_shard, block_rows,
                      needs_bounds_mask):
    s = pl.program_id(0)   # shard ("parallel")
    i = pl.program_id(1)   # block within shard ("arbitrary" / reduction)

    # Zero this shard's resident accumulators at the start of its inner loop.
    @pl.when(i == 0)
    def _():
        sum_ref[...] = jnp.zeros_like(sum_ref)
        cnt_ref[...] = jnp.zeros_like(cnt_ref)

    x_nat = x_ref[...]
    t_nat = t_ref[...]
    # Upcast on the VPU (no-op if already f32).
    x = x_nat.astype(jnp.float32)
    t = t_nat.astype(jnp.float32)
    diff = x - t
    sq = diff * diff

    mask = None
    if ignore_value is not None:
        # Compare in the target's native dtype (matches PyTorch semantics).
        mask = t_nat != jnp.asarray(ignore_value, dtype=t_nat.dtype)

    if needs_bounds_mask:
        # Mask out padded / out-of-bounds tail elements using the *unclamped*
        # global element index (int32: fine for any tensor that fits in HBM).
        block_idx = s * blocks_per_shard + i
        start = block_idx * (block_rows * LANES)
        row_ids = jax.lax.broadcasted_iota(jnp.int32, (block_rows, LANES), 0)
        col_ids = jax.lax.broadcasted_iota(jnp.int32, (block_rows, LANES), 1)
        in_bounds = (start + row_ids * LANES + col_ids) < total_n
        mask = in_bounds if mask is None else (mask & in_bounds)

    if mask is not None:
        sq = jnp.where(mask, sq, jnp.float32(0.0))

    # Sublane reduce to a (1, 128) lane vector; accumulate into the resident
    # (1, 1, 128) output block.  No cross-lane reduce until the very end.
    sum_ref[...] += jnp.sum(sq, axis=0, keepdims=True)[None]

    if ignore_value is not None:
        cnt_ref[...] += jnp.sum(mask.astype(jnp.float32),
                                axis=0, keepdims=True)[None]


def l2_loss_with_ignore(inp, target, ignore_value=None):
    """Pallas equivalent of L2LossWithIgnore.forward(input, target)."""
    n = int(inp.size)
    x = inp.reshape(-1)
    t = target.reshape(-1)

    rows = pl.cdiv(n, LANES)
    if n % LANES != 0:
        # Only sizes not divisible by 128 need this (tiny) flat pad; padded
        # values are excluded inside the kernel by the bounds mask.
        pad = rows * LANES - n
        x = jnp.pad(x, (0, pad))
        t = jnp.pad(t, (0, pad))
    x2 = x.reshape(rows, LANES)
    t2 = t.reshape(rows, LANES)

    block_rows = min(MAX_BLOCK_ROWS, rows)
    total_blocks = pl.cdiv(rows, block_rows)
    num_shards = min(NUM_SHARDS, total_blocks)
    blocks_per_shard = pl.cdiv(total_blocks, num_shards)
    coverage = num_shards * blocks_per_shard * block_rows * LANES
    needs_bounds_mask = coverage != n

    may_clamp = num_shards * blocks_per_shard > total_blocks
    if may_clamp:
        # Overshoot blocks re-read the last real block; they contribute
        # nothing because the bounds mask uses the unclamped index.
        def in_map(sh, it):
            return (jnp.minimum(sh * blocks_per_shard + it, total_blocks - 1), 0)
    else:
        def in_map(sh, it):
            return (sh * blocks_per_shard + it, 0)

    def out_map(sh, it):
        return (sh, 0, 0)

    kernel = functools.partial(
        _l2_ignore_kernel,
        ignore_value=ignore_value,
        total_n=n,
        blocks_per_shard=blocks_per_shard,
        block_rows=block_rows,
        needs_bounds_mask=needs_bounds_mask,
    )

    sum_out, cnt_out = pl.pallas_call(
        kernel,
        out_shape=(
            jax.ShapeDtypeStruct((num_shards, 1, LANES), jnp.float32),
            jax.ShapeDtypeStruct((num_shards, 1, LANES), jnp.float32),
        ),
        grid=(num_shards, blocks_per_shard),
        in_specs=[
            pl.BlockSpec((block_rows, LANES), in_map),
            pl.BlockSpec((block_rows, LANES), in_map),
        ],
        out_specs=(
            pl.BlockSpec((1, 1, LANES), out_map),
            pl.BlockSpec((1, 1, LANES), out_map),
        ),
        compiler_params=pltpu.CompilerParams(
            dimension_semantics=("parallel", "arbitrary"),
        ),
    )(x2, t2)

    total_sum = jnp.sum(sum_out)
    if ignore_value is not None:
        denom = jnp.sum(cnt_out)
    else:
        denom = jnp.float32(n)
    return total_sum / denom


def _reference(inp, target, ignore_value=None):
    x = inp.astype(jnp.float32)
    t = target.astype(jnp.float32)
    if ignore_value is not None:
        mask = target != jnp.asarray(ignore_value, dtype=target.dtype)
        sq = jnp.where(mask, (x - t) ** 2, 0.0)
        return jnp.sum(sq) / jnp.sum(mask.astype(jnp.float32))
    return jnp.mean((x - t) ** 2)


if __name__ == "__main__":
    key = jax.random.PRNGKey(0)
    k1, k2, k3 = jax.random.split(key, 3)

    ignore_value = -1.0

    # Case 1: aligned f32 NCHW input (same convention as the PyTorch module).
    B, C, H, W = 2, 4, 16, 16
    inp = jax.random.normal(k1, (B, C, H, W), dtype=jnp.float32)
    tgt = jax.random.normal(k2, (B, C, H, W), dtype=jnp.float32)
    ignore_mask = jax.random.bernoulli(k3, p=0.25, shape=(B, C, H, W))
    tgt = jnp.where(ignore_mask, jnp.float32(ignore_value), tgt)

    loss = jax.block_until_ready(l2_loss_with_ignore(inp, tgt, ignore_value))
    ref = _reference(inp, tgt, ignore_value)
    assert jnp.allclose(loss, ref, rtol=1e-5, atol=1e-6), (loss, ref)

    loss2 = jax.block_until_ready(l2_loss_with_ignore(inp, tgt, None))
    ref2 = _reference(inp, tgt, None)
    assert jnp.allclose(loss2, ref2, rtol=1e-5, atol=1e-6), (loss2, ref2)

    # Case 2: non-128-aligned shape -> exercises the in-kernel tail mask.
    s1, s2, s3 = jax.random.split(jax.random.PRNGKey(1), 3)
    shape_o = (2, 3, 15, 17)
    inp_o = jax.random.normal(s1, shape_o, dtype=jnp.float32)
    tgt_o = jax.random.normal(s2, shape_o, dtype=jnp.float32)
    m_o = jax.random.bernoulli(s3, p=0.25, shape=shape_o)
    tgt_o = jnp.where(m_o, jnp.float32(ignore_value), tgt_o)

    loss_o = jax.block_until_ready(l2_loss_with_ignore(inp_o, tgt_o, ignore_value))
    ref_o = _reference(inp_o, tgt_o, ignore_value)
    assert jnp.allclose(loss_o, ref_o, rtol=1e-5, atol=1e-6), (loss_o, ref_o)

    loss_o2 = jax.block_until_ready(l2_loss_with_ignore(inp_o, tgt_o, None))
    ref_o2 = _reference(inp_o, tgt_o, None)
    assert jnp.allclose(loss_o2, ref_o2, rtol=1e-5, atol=1e-6), (loss_o2, ref_o2)

    # Case 3: multi-block, two-shard path + native bf16 loads (no wrapper cast)
    # with a partially out-of-bounds last block handled by the bounds mask.
    b1, b2, b3 = jax.random.split(jax.random.PRNGKey(2), 3)
    shape_l = (4, 4, 128, 129)  # 264192 elems -> rows=2064 > one 2048-row block
    inp_l = jax.random.normal(b1, shape_l, dtype=jnp.bfloat16)
    tgt_l = jax.random.normal(b2, shape_l, dtype=jnp.bfloat16)
    m_l = jax.random.bernoulli(b3, p=0.25, shape=shape_l)
    tgt_l = jnp.where(m_l, jnp.bfloat16(ignore_value), tgt_l)

    loss_l = jax.block_until_ready(l2_loss_with_ignore(inp_l, tgt_l, ignore_value))
    ref_l = _reference(inp_l, tgt_l, ignore_value)
    assert jnp.allclose(loss_l, ref_l, rtol=1e-4, atol=1e-6), (loss_l, ref_l)

    print("KERNEL_OK")
</pallas_src>

<mosaic_0001>
module attributes {stable_mosaic.version = 11 : i64} {
  func.func @_l2_ignore_kernel(%arg0: i32, %arg1: i32, %arg2: memref<16x128xf32, #tpu.memory_space<vmem>>, %arg3: memref<16x128xf32, #tpu.memory_space<vmem>>, %arg4: memref<1x1x128xf32, #tpu.memory_space<vmem>>, %arg5: memref<1x1x128xf32, #tpu.memory_space<vmem>>) attributes {dimension_semantics = [#tpu.dimension_semantics<parallel>, #tpu.dimension_semantics<arbitrary>], iteration_bounds = array<i64: 1, 1>, scalar_prefetch = 0 : i64, scratch_operands = 0 : i64, tpu.core_type = #tpu.core_type<tc>, window_params = [{transform_indices = @transform_0, window_bounds = array<i64: 16, 128>}, {transform_indices = @transform_1, window_bounds = array<i64: 16, 128>}, {transform_indices = @transform_2, window_bounds = array<i64: 1, 1, 128>}, {transform_indices = @transform_3, window_bounds = array<i64: 1, 1, 128>}]} {
    %c0_i32 = arith.constant 0 : i32
    %0 = arith.cmpi eq, %arg1, %c0_i32 : i32
    %1 = arith.extui %0 : i1 to i32
    %c0_i32_0 = arith.constant 0 : i32
    %2 = arith.cmpi ne, %1, %c0_i32_0 : i32
    scf.if %2 {
      %cst_19 = arith.constant 0.000000e+00 : f32
      %25 = vector.broadcast %cst_19 : f32 to vector<1x1x128xf32>
      %c0_20 = arith.constant 0 : index
      %c0_21 = arith.constant 0 : index
      %c0_22 = arith.constant 0 : index
      %26 = vector.load %arg4[%c0_20, %c0_21, %c0_22] : memref<1x1x128xf32, #tpu.memory_space<vmem>>, vector<1x1x128xf32>
      tpu.vector_store %arg4[%c0_20, %c0_21, %c0_22], %25 {strides = array<i32>} : memref<1x1x128xf32, #tpu.memory_space<vmem>>, vector<1x1x128xf32>,
      %cst_23 = arith.constant 0.000000e+00 : f32
      %27 = vector.broadcast %cst_23 : f32 to vector<1x1x128xf32>
      %c0_24 = arith.constant 0 : index
      %c0_25 = arith.constant 0 : index
      %c0_26 = arith.constant 0 : index
      %28 = vector.load %arg5[%c0_24, %c0_25, %c0_26] : memref<1x1x128xf32, #tpu.memory_space<vmem>>, vector<1x1x128xf32>
      tpu.vector_store %arg5[%c0_24, %c0_25, %c0_26], %27 {strides = array<i32>} : memref<1x1x128xf32, #tpu.memory_space<vmem>>, vector<1x1x128xf32>,
    } else {
    }
    %c0 = arith.constant 0 : index
    %c0_1 = arith.constant 0 : index
    %3 = vector.load %arg2[%c0, %c0_1] : memref<16x128xf32, #tpu.memory_space<vmem>>, vector<16x128xf32>
    %c0_2 = arith.constant 0 : index
    %c0_3 = arith.constant 0 : index
    %4 = vector.load %arg3[%c0_2, %c0_3] : memref<16x128xf32, #tpu.memory_space<vmem>>, vector<16x128xf32>
    %5 = arith.subf %3, %4 : vector<16x128xf32>
    %6 = arith.mulf %5, %5 : vector<16x128xf32>
    %cst = arith.constant -1.000000e+00 : f32
    %7 = vector.broadcast %cst : f32 to vector<16x128xf32>
    %8 = arith.cmpf one, %4, %7 : vector<16x128xf32>
    %cst_4 = arith.constant 0.000000e+00 : f32
    %9 = vector.broadcast %cst_4 : f32 to vector<16x128xf32>
    %10 = arith.select %8, %6, %9 : vector<16x128xi1>, vector<16x128xf32>
    %c0_5 = arith.constant 0 : index
    %c0_6 = arith.constant 0 : index
    %c0_7 = arith.constant 0 : index
    %11 = vector.load %arg4[%c0_5, %c0_6, %c0_7] : memref<1x1x128xf32, #tpu.memory_space<vmem>>, vector<1x1x128xf32>
    %cst_8 = arith.constant dense<0.000000e+00> : vector<128xf32>
    %12 = vector.multi_reduction <add>, %10, %cst_8 [0] : vector<16x128xf32> to vector<128xf32>
    %13 = vector.shape_cast %12 : vector<128xf32> to vector<1x128xf32>
    %14 = vector.shape_cast %13 : vector<1x128xf32> to vector<1x1x128xf32>
    %15 = arith.addf %11, %14 : vector<1x1x128xf32>
    %c0_9 = arith.constant 0 : index
    %c0_10 = arith.constant 0 : index
    %c0_11 = arith.constant 0 : index
    %16 = vector.load %arg4[%c0_9, %c0_10, %c0_11] : memref<1x1x128xf32, #tpu.memory_space<vmem>>, vector<1x1x128xf32>
    tpu.vector_store %arg4[%c0_9, %c0_10, %c0_11], %15 {strides = array<i32>} : memref<1x1x128xf32, #tpu.memory_space<vmem>>, vector<1x1x128xf32>,
    %c0_12 = arith.constant 0 : index
    %c0_13 = arith.constant 0 : index
    %c0_14 = arith.constant 0 : index
    %17 = vector.load %arg5[%c0_12, %c0_13, %c0_14] : memref<1x1x128xf32, #tpu.memory_space<vmem>>, vector<1x1x128xf32>
    %18 = arith.extui %8 : vector<16x128xi1> to vector<16x128xi32>
    %19 = arith.sitofp %18 : vector<16x128xi32> to vector<16x128xf32>
    %cst_15 = arith.constant dense<0.000000e+00> : vector<128xf32>
    %20 = vector.multi_reduction <add>, %19, %cst_15 [0] : vector<16x128xf32> to vector<128xf32>
    %21 = vector.shape_cast %20 : vector<128xf32> to vector<1x128xf32>
    %22 = vector.shape_cast %21 : vector<1x128xf32> to vector<1x1x128xf32>
    %23 = arith.addf %17, %22 : vector<1x1x128xf32>
    %c0_16 = arith.constant 0 : index
    %c0_17 = arith.constant 0 : index
    %c0_18 = arith.constant 0 : index
    %24 = vector.load %arg5[%c0_16, %c0_17, %c0_18] : memref<1x1x128xf32, #tpu.memory_space<vmem>>, vector<1x1x128xf32>
    tpu.vector_store %arg5[%c0_16, %c0_17, %c0_18], %23 {strides = array<i32>} : memref<1x1x128xf32, #tpu.memory_space<vmem>>, vector<1x1x128xf32>,
    return
  }
  func.func @transform_0(%arg0: i32, %arg1: i32) -> (i32, i32) {
    %c1_i32 = arith.constant 1 : i32
    %0 = arith.muli %arg0, %c1_i32 : i32
    %1 = arith.addi %0, %arg1 : i32
    %c0_i32 = arith.constant 0 : i32
    %c0_i32_0 = arith.constant 0 : i32
    return %1, %c0_i32 : i32, i32
  }
  func.func @transform_1(%arg0: i32, %arg1: i32) -> (i32, i32) {
    %c1_i32 = arith.constant 1 : i32
    %0 = arith.muli %arg0, %c1_i32 : i32
    %1 = arith.addi %0, %arg1 : i32
    %c0_i32 = arith.constant 0 : i32
    %c0_i32_0 = arith.constant 0 : i32
    return %1, %c0_i32 : i32, i32
  }
  func.func @transform_2(%arg0: i32, %arg1: i32) -> (i32, i32, i32) {
    %c0_i32 = arith.constant 0 : i32
    %c0_i32_0 = arith.constant 0 : i32
    %c0_i32_1 = arith.constant 0 : i32
    return %arg0, %c0_i32, %c0_i32_0 : i32, i32, i32
  }
  func.func @transform_3(%arg0: i32, %arg1: i32) -> (i32, i32, i32) {
    %c0_i32 = arith.constant 0 : i32
    %c0_i32_0 = arith.constant 0 : i32
    %c0_i32_1 = arith.constant 0 : i32
    return %arg0, %c0_i32, %c0_i32_0 : i32, i32, i32
  }
}

</mosaic_0001>

<llo_original>
// kernel: tpu_custom_call.1
$region0: #{tpu_custom_call.1}
  #allocation0 [shape = 'u32[]', space=smem, size = 0x4, offset = 0x4, fixed_abs, tag = 'smem constant byte address 0x4 - core index']
  #allocation1 [shape = 'u32[144,128]{1,0:T(1,128)}', space=vmem, size = 0x12000, scoped, tag = 'internal scratch']
  %s0 = inlined_call_operand.hbm [shape: f32[16,128], index: 0, kind: input, shape index: {}]
  %s1 = inlined_call_operand.hbm [shape: f32[16,128], index: 1, kind: input, shape index: {}]
  %s2 = inlined_call_operand.hbm [shape: f32[1,1,128], index: 2, kind: output, shape index: {0}]
  %s3 = inlined_call_operand.hbm [shape: f32[1,1,128], index: 3, kind: output, shape index: {1}]
  %4 = xla_tuple %s2, %s3
  %s5 = sld [smem:[#allocation0]]
  $region38: #{tpu_custom_call.1} parent=0
    _
  %s7 = ssub.s32 1, %s5
  %s8 = scalar_select 0, %s7, %s5
  $region1: #{tpu_custom_call.1} parent=0
    #allocation2 [shape = 'u8[8192]{0}', space=vmem, size = 0x2000, scoped, tag = 'input window, operand 0, single buffered']
    #allocation3 [shape = 's32[1]{0}', space=sflag, size = 0x4, scoped, tag = 'scoped memory for tpu_custom_call.1']
    #allocation4 [shape = 's32[1]{0}', space=sflag, size = 0x4, scoped, tag = 'scoped memory for tpu_custom_call.1']
    #allocation5 [shape = 'u8[8192]{0}', space=vmem, size = 0x2000, scoped, tag = 'input window, operand 1, single buffered']
    #allocation6 [shape = 's32[1]{0}', space=sflag, size = 0x4, scoped, tag = 'scoped memory for tpu_custom_call.1']
    #allocation7 [shape = 'u8[512]{0}', space=vmem, size = 0x400, scoped, tag = 'output window, operand 0, single buffered']
    #allocation8 [shape = 'u8[512]{0}', space=vmem, size = 0x400, scoped, tag = 'output window, operand 1, single buffered']
    #allocation9 [shape = 's32[1]{0}', space=sflag, size = 0x4, scoped, tag = 'scoped memory for tpu_custom_call.1']
    %9 = vsyncpa [#allocation3], 0
    %10 = vsyncpa [#allocation6], 0
    %11 = vsyncpa [#allocation4], 0
    %12 = vsyncpa [#allocation9], 0
    // Predicated region
    $region2: #{tpu_custom_call.1} parent=1 // pred_check
      _
    $region3: #{tpu_custom_call.1} parent=1 // pred_check_branch
      %14 = sbr.rel (0) target = $region5
    $region4: #{tpu_custom_call.1} parent=1 // pred_region
      %s15 = sadd.s32 0, 0
      %s16 = smul.u32 2, %s15
      %s18 = ssub.s32 256, 256
      %19 = vsyncadd [#allocation3], %s18
      %s20 = smul.addr %s16, 128
      %s21 = scalar_lea.hbm %s0, %s20
      %s22 = sshll.u32 [#allocation2], 4
      %s23 = int_to_ptr.vmem [resolvable:$true] %s22
      %28 = dma.hbm_to_vmem [thread:$0]  %s21, 256, %s23, [#allocation3], 128, 128, 8
    $region5: #{tpu_custom_call.1} parent=1 // pred_fallthru
      _
    // Predicated region
    $region6: #{tpu_custom_call.1} parent=1 // pred_check
      _
    $region7: #{tpu_custom_call.1} parent=1 // pred_check_branch
      %30 = sbr.rel (0) target = $region9
    $region8: #{tpu_custom_call.1} parent=1 // pred_region
      %s31 = sadd.s32 0, 0
      %s32 = smul.u32 2, %s31
      %s34 = ssub.s32 256, 256
      %35 = vsyncadd [#allocation6], %s34
      %s36 = smul.addr %s32, 128
      %s37 = scalar_lea.hbm %s1, %s36
      %s38 = sshll.u32 [#allocation5], 4
      %s39 = int_to_ptr.vmem [resolvable:$true] %s38
      %44 = dma.hbm_to_vmem [thread:$0]  %s37, 256, %s39, [#allocation6], 128, 128, 8
    $region9: #{tpu_custom_call.1} parent=1 // pred_fallthru
      _
    // Predicated region
    $region10: #{tpu_custom_call.1} parent=1 // pred_check
      _
    $region11: #{tpu_custom_call.1} parent=1 // pred_check_branch
      %46 = sbr.rel (0) target = $region13
    $region12: #{tpu_custom_call.1} parent=1 // pred_region
      %47 = dma.done [#allocation3], 256
    $region13: #{tpu_custom_call.1} parent=1 // pred_fallthru
      _
    // Predicated region
    $region14: #{tpu_custom_call.1} parent=1 // pred_check
      _
    $region15: #{tpu_custom_call.1} parent=1 // pred_check_branch
      %49 = sbr.rel (0) target = $region17
    $region16: #{tpu_custom_call.1} parent=1 // pred_region
      %50 = dma.done [#allocation6], 256
    $region17: #{tpu_custom_call.1} parent=1 // pred_fallthru
      _
    %s51 = sadd.s32 0, 0
    %s52 = smul.u32 2, %s51
    %s53 = sadd.s32 0, 0
    %s54 = smul.u32 2, %s53
    %p55 = scmp.eq.s32.totalorder 0, 0
    // Predicated region
    $region18: #{tpu_custom_call.1} parent=1 // pred_check
      %p56 = pneg %p55
    $region19: #{tpu_custom_call.1} parent=1 // pred_check_branch
      %58 = sbr.rel (%p56) target = $region21
    $region20: #{tpu_custom_call.1} parent=1 // pred_region
      %59 = vst [vmem:[#allocation7] sm:$0x1] 0.0
      %60 = vst [vmem:[#allocation8] sm:$0x1] 0.0
    $region21: #{tpu_custom_call.1} parent=1 // pred_fallthru
      _
    %v61 = vld [vmem:[#allocation2] sm:$0xff]
    %v62 = vld [vmem:[#allocation2 + $0x8] sm:$0xff]
    %v63 = vld [vmem:[#allocation5] sm:$0xff]
    %v64 = vld [vmem:[#allocation5 + $0x8] sm:$0xff]
    %v65 = vsub.f32 %v61, %v63
    %v66 = vsub.f32 %v62, %v64
    %v67 = vmul.f32 %v65, %v65
    %v68 = vmul.f32 %v66, %v66
    %vm69 = vcmp.ne.f32.partialorder %v63, -1.0
    %vm70 = vcmp.ne.f32.partialorder %v64, -1.0
    %v71 = vsel %vm69, %v67, 0.0
    %v72 = vsel %vm70, %v68, 0.0
    %v73 = vld [vmem:[#allocation7] sm:$0x1]
    %v74 = vadd.f32 %v71, %v72
    %v75 = vrot.slane %v74, 4
    %v76 = vadd.f32 %v74, %v75
    %v77 = vrot.slane %v76, 2
    %v78 = vadd.f32 %v76, %v77
    %v79 = vrot.slane %v78, 1
    %v80 = vadd.f32 %v78, %v79
    %v81 = vadd.f32 %v73, %v80
    %82 = vst [vmem:[#allocation7] sm:$0x1] %v81
    %v83 = vld [vmem:[#allocation8] sm:$0x1]
    %v84 = vsel %vm69, 1, 0
    %v85 = vsel %vm70, 1, 0
    %v86 = vcvt.s32.f32 %v84
    %v87 = vcvt.s32.f32 %v85
    %v88 = vadd.f32 %v86, %v87
    %v89 = vrot.slane %v88, 4
    %v90 = vadd.f32 %v88, %v89
    %v91 = vrot.slane %v90, 2
    %v92 = vadd.f32 %v90, %v91
    %v93 = vrot.slane %v92, 1
    %v94 = vadd.f32 %v92, %v93
    %v95 = vadd.f32 %v83, %v94
    %96 = vst [vmem:[#allocation8] sm:$0x1] %v95
    // Predicated region
    $region22: #{tpu_custom_call.1} parent=1 // pred_check
      _
    $region23: #{tpu_custom_call.1} parent=1 // pred_check_branch
      %98 = sbr.rel (0) target = $region25
    $region24: #{tpu_custom_call.1} parent=1 // pred_region
      %s100 = ssub.s32 16, 16
      %101 = vsyncadd [#allocation4], %s100
      %s103 = sshll.u32 [#allocation7], 4
      %s104 = int_to_ptr.vmem [resolvable:$true] %s103
      %106 = dma.vmem_to_hbm [thread:$0]  %s104, 16, %s2, [#allocation4]
    $region25: #{tpu_custom_call.1} parent=1 // pred_fallthru
      _
    // Predicated region
    $region26: #{tpu_custom_call.1} parent=1 // pred_check
      _
    $region27: #{tpu_custom_call.1} parent=1 // pred_check_branch
      %108 = sbr.rel (0) target = $region29
    $region28: #{tpu_custom_call.1} parent=1 // pred_region
      %s110 = ssub.s32 16, 16
      %111 = vsyncadd [#allocation9], %s110
      %s113 = sshll.u32 [#allocation8], 4
      %s114 = int_to_ptr.vmem [resolvable:$true] %s113
      %116 = dma.vmem_to_hbm [thread:$0]  %s114, 16, %s3, [#allocation9]
    $region29: #{tpu_custom_call.1} parent=1 // pred_fallthru
      _
    // Predicated region
    $region30: #{tpu_custom_call.1} parent=1 // pred_check
      _
    $region31: #{tpu_custom_call.1} parent=1 // pred_check_branch
      %118 = sbr.rel (0) target = $region33
    $region32: #{tpu_custom_call.1} parent=1 // pred_region
      %119 = dma.done [#allocation4], 16
    $region33: #{tpu_custom_call.1} parent=1 // pred_fallthru
      _
    // Predicated region
    $region34: #{tpu_custom_call.1} parent=1 // pred_check
      _
    $region35: #{tpu_custom_call.1} parent=1 // pred_check_branch
      %121 = sbr.rel (0) target = $region37
    $region36: #{tpu_custom_call.1} parent=1 // pred_region
      %122 = dma.done [#allocation9], 16
    $region37: #{tpu_custom_call.1} parent=1 // pred_fallthru
      _
    %123 = vsyncpa [#allocation3], 1
    %124 = vsyncpa [#allocation6], 1
    %125 = vsyncpa [#allocation4], 1
    %126 = vsyncpa [#allocation9], 1

</llo_original>
